<compile_context>
chip_gen: v7x
topology: tpu7x:2x2x1
jax: 0.10.0
libtpu: 0.0.40
codegen_flags: <defaults>
</compile_context>

<pallas_src>
import math

import jax
import jax.numpy as jnp
from jax.experimental import pallas as pl
from jax.experimental.pallas import tpu as pltpu


def _round_up(a, b):
    return -(-a // b) * b


def _fit_tile(dim, want, gran=128):
    """Largest tile <= want that is a multiple of `gran` and divides
    round_up(dim, gran); prefers 256-aligned tiles (v6e/v7x MXU shape)."""
    d = _round_up(dim, gran)
    want = max(gran, min(_round_up(want, gran), d))
    for t in range(want, gran - 1, -gran):
        if d % t == 0 and t % 256 == 0:
            return t
    for t in range(want, gran - 1, -gran):
        if d % t == 0:
            return t
    return gran


# Contract the last dim of x (tm, tk) with the last dim of weight (tn, tk):
# y = x @ w.T without any wrapper-side transpose of the weight.
_CONTRACT_LAST = (((1,), (1,)), ((), ()))


def _mm_oneshot_kernel(x_ref, w_ref, o_ref):
    """Whole contraction in one shot (resident weight, or a single K block)."""
    o_ref[...] = jax.lax.dot_general(
        x_ref[...], w_ref[...],
        dimension_numbers=_CONTRACT_LAST,
        preferred_element_type=jnp.float32,
    ).astype(o_ref.dtype)


def _mm_f32_accum_kernel(x_ref, w_ref, o_ref):
    """f32 output: accumulate straight into the K-resident output block."""
    @pl.when(pl.program_id(2) == 0)
    def _():
        o_ref[...] = jnp.zeros_like(o_ref)

    o_ref[...] += jax.lax.dot_general(
        x_ref[...], w_ref[...],
        dimension_numbers=_CONTRACT_LAST,
        preferred_element_type=jnp.float32,
    )


def _mm_scratch_accum_kernel(x_ref, w_ref, o_ref, acc_ref):
    """Narrow output dtype: f32 scratch accumulator, cast on the last K step."""
    @pl.when(pl.program_id(2) == 0)
    def _():
        acc_ref[...] = jnp.zeros_like(acc_ref)

    acc_ref[...] += jax.lax.dot_general(
        x_ref[...], w_ref[...],
        dimension_numbers=_CONTRACT_LAST,
        preferred_element_type=jnp.float32,
    )

    @pl.when(pl.program_id(2) == pl.num_programs(2) - 1)
    def _():
        o_ref[...] = acc_ref[...].astype(o_ref.dtype)


def linear_norm(x, weight):
    """y = x @ weight.T  (nn.Linear with bias=False)."""
    out_features, in_features = weight.shape
    orig_lead = x.shape[:-1]
    x2d = x.reshape(-1, in_features)
    M, K = x2d.shape
    N = out_features

    in_bytes = jnp.dtype(x.dtype).itemsize
    out_dtype = x.dtype
    out_bytes = jnp.dtype(out_dtype).itemsize
    out_is_f32 = jnp.dtype(out_dtype) == jnp.dtype(jnp.float32)
    sub = max(8, 32 // in_bytes)  # sublane granularity: 8 (f32) / 16 (bf16)

    # --- chip query ---------------------------------------------------------
    try:
        info = pltpu.get_tpu_info()
    except Exception:
        info = None
    vmem_cap = int(getattr(info, "vmem_capacity_bytes", 64 << 20) or (64 << 20))
    num_cores = 1
    for attr in ("num_cores", "core_count", "num_tensorcores"):
        v = getattr(info, attr, None)
        if isinstance(v, int) and v > 0:
            num_cores = v
            break
    budget = vmem_cap // 2  # leave headroom for compiler-internal scratch

    # --- path selection: resident weight vs. tiled K-reduction ---------------
    def resident_footprint(bm):
        return (2 * N * K * in_bytes        # weight (double-buffer, conservative)
                + 2 * bm * K * in_bytes     # x blocks
                + 2 * bm * N * out_bytes)   # output blocks

    tm_r = min(_round_up(512, sub), _round_up(M, sub))
    while resident_footprint(tm_r) > budget and tm_r > sub:
        tm_r = max(sub, (tm_r // 2) // sub * sub)
    use_resident = resident_footprint(tm_r) <= budget

    if use_resident:
        # Give a 2-TC chip (v7x) two M blocks to shard; pointless on 1-TC chips.
        if num_cores >= 2 and _round_up(M, sub) <= tm_r and M >= 2 * sub:
            tm_r = max(sub, _round_up(-(-M // 2), sub))
        tm = tm_r
        Mp = _round_up(M, tm)
        if Mp != M:
            x2d = jnp.pad(x2d, ((0, Mp - M), (0, 0)))   # cheap activation pad only
        w = weight                                       # no weight pad / transpose
        grid = (Mp // tm,)
        in_specs = [
            pl.BlockSpec((tm, K), lambda i: (i, 0)),     # x tile
            pl.BlockSpec((N, K), lambda i: (0, 0)),      # full weight, fetched once
        ]
        out_specs = pl.BlockSpec((tm, N), lambda i: (i, 0))
        out_shape = jax.ShapeDtypeStruct((Mp, N), out_dtype)
        kernel, scratch = _mm_oneshot_kernel, []
        semantics = ("parallel",)
        footprint = resident_footprint(tm)
    else:
        tm = min(_round_up(512, sub), _round_up(M, sub))
        tn = min(_round_up(1024, 128), _round_up(N, 128))
        tk = min(_round_up(1024, 128), _round_up(K, 128))

        def tiled_footprint(bm, bn, bk):
            f = (2 * (bm * bk + bn * bk) * in_bytes      # double-buffered inputs
                 + 2 * bm * bn * out_bytes)              # double-buffered output
            if not out_is_f32:
                f += bm * bn * 4                         # f32 scratch accumulator
            return f

        # Shrink tn/tm before tk: the (tm, tn) accumulator RMW is paid once per
        # K step, so a large tk amortizes it best (esp. v5e's single vst slot).
        while tiled_footprint(tm, tn, tk) > budget:
            if tn > 128 and tn >= tm:
                tn = max(128, (tn // 2) // 128 * 128)
            elif tm > sub:
                tm = max(sub, (tm // 2) // sub * sub)
            elif tk > 128:
                tk = max(128, (tk // 2) // 128 * 128)
            else:
                break

        # Fit tn/tk to divisors of the 128-rounded dims (preferring 256-aligned)
        # so the weight pad below is a no-op for power-of-two layer sizes.
        tn = _fit_tile(N, tn)
        tk = _fit_tile(K, tk)

        # Split a lone output block only when there are >= 2 TensorCores (v7x).
        if (num_cores >= 2
                and pl.cdiv(M, tm) * pl.cdiv(N, tn) < 2
                and M * N >= 2 * 128 * 128):
            if tn >= 256:
                tn = _fit_tile(N, tn // 2)
            elif tm >= 2 * sub:
                tm = max(sub, _round_up(tm // 2, sub))

        Mp, Kp, Np = _round_up(M, tm), _round_up(K, tk), _round_up(N, tn)
        if (Mp, Kp) != (M, K):
            x2d = jnp.pad(x2d, ((0, Mp - M), (0, Kp - K)))
        w = weight
        if (Np, Kp) != (N, K):
            # TODO(synk): for ragged N/K, pre-pad (or pre-layout) the weight once
            # outside the per-forward hot path instead of on every call.
            w = jnp.pad(weight, ((0, Np - N), (0, Kp - K)))

        grid = (Mp // tm, Np // tn, Kp // tk)
        k_steps = grid[2]
        if k_steps == 1:
            kernel, scratch = _mm_oneshot_kernel, []
        elif out_is_f32:
            kernel, scratch = _mm_f32_accum_kernel, []
        else:
            kernel, scratch = _mm_scratch_accum_kernel, [pltpu.VMEM((tm, tn), jnp.float32)]
        in_specs = [
            pl.BlockSpec((tm, tk), lambda i, j, k: (i, k)),   # x tile
            pl.BlockSpec((tn, tk), lambda i, j, k: (j, k)),   # weight tile (N, K)
        ]
        out_specs = pl.BlockSpec((tm, tn), lambda i, j, k: (i, j))
        out_shape = jax.ShapeDtypeStruct((Mp, Np), out_dtype)
        semantics = ("parallel", "parallel", "arbitrary")
        footprint = tiled_footprint(tm, tn, tk)

    cost = pl.CostEstimate(
        flops=2 * M * N * K,
        bytes_accessed=(M * K + N * K) * in_bytes + M * N * out_bytes,
        transcendentals=0,
    )
    vmem_limit = int(min(vmem_cap * 3 // 4, max(32 << 20, 2 * footprint)))

    out = pl.pallas_call(
        kernel,
        out_shape=out_shape,
        grid_spec=pltpu.PrefetchScalarGridSpec(
            num_scalar_prefetch=0,
            grid=grid,
            in_specs=in_specs,
            out_specs=out_specs,
            scratch_shapes=scratch,
        ),
        compiler_params=pltpu.CompilerParams(
            dimension_semantics=semantics,
            vmem_limit_bytes=vmem_limit,
        ),
        cost_estimate=cost,
    )(x2d, w)

    if out.shape != (M, N):
        out = out[:M, :N]
    return out.reshape(*orig_lead, out_features)


def xavier_uniform(key, out_features, in_features, dtype=jnp.float32):
    # matches nn.init.xavier_uniform_ for a (out, in) Linear weight
    bound = math.sqrt(6.0 / (in_features + out_features))
    return jax.random.uniform(
        key, (out_features, in_features), dtype=dtype, minval=-bound, maxval=bound
    )


if __name__ == "__main__":
    key = jax.random.PRNGKey(0)
    k_x, k_w = jax.random.split(key)

    batch, seq, in_features, out_features = 2, 8, 32, 64
    x = jax.random.normal(k_x, (batch, seq, in_features), dtype=jnp.float32)
    weight = xavier_uniform(k_w, out_features, in_features)

    y = jax.block_until_ready(linear_norm(x, weight))

    # correctness check against plain JAX reference (nn.Linear, bias=False)
    y_ref = x @ weight.T
    assert y.shape == (batch, seq, out_features)
    assert jnp.allclose(y, y_ref, atol=1e-5, rtol=1e-5)
    print("KERNEL_OK")
</pallas_src>

<mosaic_0001>
module attributes {stable_mosaic.version = 11 : i64} {
  func.func @_mm_oneshot_kernel(%arg0: i32, %arg1: memref<16x32xf32, #tpu.memory_space<vmem>>, %arg2: memref<64x32xf32, #tpu.memory_space<vmem>>, %arg3: memref<16x64xf32, #tpu.memory_space<vmem>>) attributes {dimension_semantics = [#tpu.dimension_semantics<parallel>], iteration_bounds = array<i64: 1>, scalar_prefetch = 0 : i64, scratch_operands = 0 : i64, tpu.core_type = #tpu.core_type<tc>, window_params = [{transform_indices = @transform_0, window_bounds = array<i64: 16, 32>}, {pipeline_mode = #tpu.pipeline_mode<synchronous>, transform_indices = @transform_1, window_bounds = array<i64: 64, 32>}, {transform_indices = @transform_2, window_bounds = array<i64: 16, 64>}]} {
    %c0 = arith.constant 0 : index
    %c0_0 = arith.constant 0 : index
    %0 = vector.load %arg1[%c0, %c0_0] : memref<16x32xf32, #tpu.memory_space<vmem>>, vector<16x32xf32>
    %c0_1 = arith.constant 0 : index
    %c0_2 = arith.constant 0 : index
    %1 = vector.load %arg2[%c0_1, %c0_2] : memref<64x32xf32, #tpu.memory_space<vmem>>, vector<64x32xf32>
    %cst = arith.constant dense<0.000000e+00> : vector<16x64xf32>
    %2 = tpu.matmul %0, %1, %cst {dimension_numbers = #tpu.dot_dimension_numbers<[1], [1], [0], [0], [0, 0, 1, 0], [], []>} : vector<16x32xf32>, vector<64x32xf32>, vector<16x64xf32> -> vector<16x64xf32>
    %c0_3 = arith.constant 0 : index
    %c0_4 = arith.constant 0 : index
    %3 = vector.load %arg3[%c0_3, %c0_4] : memref<16x64xf32, #tpu.memory_space<vmem>>, vector<16x64xf32>
    tpu.vector_store %arg3[%c0_3, %c0_4], %2 {strides = array<i32>} : memref<16x64xf32, #tpu.memory_space<vmem>>, vector<16x64xf32>,
    return
  }
  func.func @transform_0(%arg0: i32) -> (i32, i32) {
    %c0_i32 = arith.constant 0 : i32
    %c0_i32_0 = arith.constant 0 : i32
    return %arg0, %c0_i32 : i32, i32
  }
  func.func @transform_1(%arg0: i32) -> (i32, i32) {
    %c0_i32 = arith.constant 0 : i32
    %c0_i32_0 = arith.constant 0 : i32
    %c0_i32_1 = arith.constant 0 : i32
    return %c0_i32, %c0_i32_0 : i32, i32
  }
  func.func @transform_2(%arg0: i32) -> (i32, i32) {
    %c0_i32 = arith.constant 0 : i32
    %c0_i32_0 = arith.constant 0 : i32
    return %arg0, %c0_i32 : i32, i32
  }
}

</mosaic_0001>

<llo_original>
// kernel: tpu_custom_call.1
$region0: #{tpu_custom_call.1}
  #allocation0 [shape = 'u32[]', space=smem, size = 0x4, offset = 0x4, fixed_abs, tag = 'smem constant byte address 0x4 - core index']
  #allocation1 [shape = 'u32[144,128]{1,0:T(1,128)}', space=vmem, size = 0x12000, scoped, tag = 'internal scratch']
  %s0 = inlined_call_operand.vmem [shape: f32[16,32], index: 0, kind: input, shape index: {}]
  %s1 = inlined_call_operand.vmem [shape: f32[64,32], index: 1, kind: input, shape index: {}]
  %s2 = inlined_call_operand.hbm [shape: f32[16,64], index: 2, kind: output, shape index: {}]
  %s3 = sld [smem:[#allocation0]]
  $region18: #{tpu_custom_call.1} parent=0
    _
  %s5 = ssub.s32 1, %s3
  %s6 = scalar_select 0, %s5, %s3
  $region1: #{tpu_custom_call.1} parent=0
    #allocation2 [shape = 'u8[8192]{0}', space=vmem, size = 0x2000, scoped, tag = 'output window, operand 0, single buffered']
    #allocation3 [shape = 's32[1]{0}', space=sflag, size = 0x4, scoped, tag = 'scoped memory for tpu_custom_call.1']
    %7 = vsyncpa [#allocation3], 0
    // Predicated region
    $region2: #{tpu_custom_call.1} parent=1 // pred_check
      _
    $region3: #{tpu_custom_call.1} parent=1 // pred_check_branch
      %9 = sbr.rel (0) target = $region5
    $region4: #{tpu_custom_call.1} parent=1 // pred_region
      _
    $region5: #{tpu_custom_call.1} parent=1 // pred_fallthru
      _
    // Predicated region
    $region6: #{tpu_custom_call.1} parent=1 // pred_check
      _
    $region7: #{tpu_custom_call.1} parent=1 // pred_check_branch
      %11 = sbr.rel (0) target = $region9
    $region8: #{tpu_custom_call.1} parent=1 // pred_region
      _
    $region9: #{tpu_custom_call.1} parent=1 // pred_fallthru
      _
    %v12 = vld [vmem:[%s0] sm:$0xff]
    %v13 = vld [vmem:[%s0 + $0x8] sm:$0xff]
    %v14 = vld [vmem:[%s1] sm:$0xff]
    %v15 = vld [vmem:[%s1 + $0x8] sm:$0xff]
    %v16 = vld [vmem:[%s1 + $0x10] sm:$0xff]
    %v17 = vld [vmem:[%s1 + $0x18] sm:$0xff]
    %v18 = vld [vmem:[%s1 + $0x20] sm:$0xff]
    %v19 = vld [vmem:[%s1 + $0x28] sm:$0xff]
    %v20 = vld [vmem:[%s1 + $0x30] sm:$0xff]
    %v21 = vld [vmem:[%s1 + $0x38] sm:$0xff]
    %vm22 = vcmask 261120
    %v24 = vsel %vm22, %v12, 0
    %v27 = vsel %vm22, %v13, 0
    %v30 = vsel %vm22, %v14, 0
    %v33 = vsel %vm22, %v15, 0
    %v36 = vsel %vm22, %v16, 0
    %v39 = vsel %vm22, %v17, 0
    %v42 = vsel %vm22, %v18, 0
    %v45 = vsel %vm22, %v19, 0
    %v48 = vsel %vm22, %v20, 0
    %v51 = vsel %vm22, %v21, 0
    %53 = vmatprep.subr.mxu0 0.0
    %54 = vmatpush1.xpose.msra.mxu0 %v30
    %55 = vmatprep.subr.mxu0 0.0
    %56 = vmatpush1.xpose.msra.mxu0 %v33
    %57 = vmatprep.subr.mxu0 0.0
    %58 = vmatpush1.xpose.msra.mxu0 %v36
    %59 = vmatprep.subr.mxu0 0.0
    %60 = vmatpush1.xpose.msra.mxu0 %v39
    %61 = vmatprep.subr.mxu0 0.0
    %62 = vmatpush1.xpose.msra.mxu0 %v42
    %63 = vmatprep.subr.mxu0 0.0
    %64 = vmatpush1.xpose.msra.mxu0 %v45
    %65 = vmatprep.subr.mxu0 0.0
    %66 = vmatpush1.xpose.msra.mxu0 %v48
    %67 = vmatprep.subr.mxu0 0.0
    %68 = vmatpush1.xpose.msra.mxu0 %v51
    %69 = vmatprep.subr.mxu0 0.0
    %70 = vmatpush1.xpose.msra.mxu0 0.0
    %71 = vmatprep.subr.mxu0 0.0
    %72 = vmatpush1.xpose.msra.mxu0 0.0
    %73 = vmatprep.subr.mxu0 0.0
    %74 = vmatpush1.xpose.msra.mxu0 0.0
    %75 = vmatprep.subr.mxu0 0.0
    %76 = vmatpush1.xpose.msra.mxu0 0.0
    %77 = vmatprep.subr.mxu0 0.0
    %78 = vmatpush1.xpose.msra.mxu0 0.0
    %79 = vmatprep.subr.mxu0 0.0
    %80 = vmatpush1.xpose.msra.mxu0 0.0
    %81 = vmatprep.subr.mxu0 0.0
    %82 = vmatpush1.xpose.msra.mxu0 0.0
    %83 = vmatprep.subr.mxu0 0.0
    %84 = vmatpush1.xpose.msra.mxu0 0.0
    %85 = vmatprep.subr.mxu0 0.0
    %86 = vmatpush1.xpose.msra.mxu0 0.0
    %87 = vmatprep.subr.mxu0 0.0
    %88 = vmatpush1.xpose.msra.mxu0 0.0
    %89 = vmatprep.subr.mxu0 0.0
    %90 = vmatpush1.xpose.msra.mxu0 0.0
    %91 = vmatprep.subr.mxu0 0.0
    %92 = vmatpush1.xpose.msra.mxu0 0.0
    %93 = vmatprep.subr.mxu0 0.0
    %94 = vmatpush1.xpose.msra.mxu0 0.0
    %95 = vmatprep.subr.mxu0 0.0
    %96 = vmatpush1.xpose.msra.mxu0 0.0
    %97 = vmatprep.subr.mxu0 0.0
    %98 = vmatpush1.xpose.msra.mxu0 0.0
    %99 = vmatprep.subr.mxu0 0.0
    %100 = vmatpush1.xpose.msra.mxu0 0.0
    %101 = vmatprep.subr.mxu0 0.0
    %102 = vmatpush1.xpose.msra.mxu0 0.0
    %103 = vmatprep.subr.mxu0 0.0
    %104 = vmatpush1.xpose.msra.mxu0 0.0
    %105 = vmatprep.subr.mxu0 0.0
    %106 = vmatpush1.xpose.msra.mxu0 0.0
    %107 = vmatprep.subr.mxu0 0.0
    %108 = vmatpush1.xpose.msra.mxu0 0.0
    %109 = vmatprep.subr.mxu0 0.0
    %110 = vmatpush1.xpose.msra.mxu0 0.0
    %111 = vmatprep.subr.mxu0 0.0
    %112 = vmatpush1.xpose.msra.mxu0 0.0
    %113 = vmatprep.subr.mxu0 0.0
    %114 = vmatpush1.xpose.msra.mxu0 0.0
    %115 = vmatprep.subr.mxu0 0.0
    %116 = vmatpush1.xpose.msra.mxu0 0.0
    %117 = vmatprep.mubr.f32.mxu0 0.0
    %118 = vmatmul.mubr.f32.gmra.mrb[0].mxu0 %v24
    %v119 = vpop.f32.mrb[0].mxu0
    %v120 = vadd.f32 0.0, %v119
    %v121 = vpop.f32.mrb[0].mxu0
    %122 = vmatprep.mubr.f32.mxu0 0.0
    %123 = vmatmul.mubr.f32.gmra.mrb[0].mxu0 %v27
    %v124 = vpop.f32.mrb[0].mxu0
    %v125 = vadd.f32 0.0, %v124
    %v126 = vpop.f32.mrb[0].mxu0
    %127 = vdwg.mxu0
    %vm128 = vcmask 523264
    %129 = vst.msk [vmem:[#allocation2] sm:$0xff] %vm128, %v120
    %130 = vst.msk [vmem:[#allocation2 + $0x8] sm:$0xff] %vm128, %v125
    // Predicated region
    $region10: #{tpu_custom_call.1} parent=1 // pred_check
      _
    $region11: #{tpu_custom_call.1} parent=1 // pred_check_branch
      %132 = sbr.rel (0) target = $region13
    $region12: #{tpu_custom_call.1} parent=1 // pred_region
      %s134 = ssub.s32 256, 256
      %135 = vsyncadd [#allocation3], %s134
      %s136 = sshll.u32 [#allocation2], 4
      %s137 = int_to_ptr.vmem [resolvable:$true] %s136
      %142 = dma.vmem_to_hbm [thread:$0]  %s137, 256, %s2, [#allocation3], 128, 128, 8
    $region13: #{tpu_custom_call.1} parent=1 // pred_fallthru
      _
    // Predicated region
    $region14: #{tpu_custom_call.1} parent=1 // pred_check
      _
    $region15: #{tpu_custom_call.1} parent=1 // pred_check_branch
      %144 = sbr.rel (0) target = $region17
    $region16: #{tpu_custom_call.1} parent=1 // pred_region
      %145 = dma.done [#allocation3], 256
    $region17: #{tpu_custom_call.1} parent=1 // pred_fallthru
      _
    %146 = vsyncpa [#allocation3], 1

</llo_original>
